<compile_context>
chip_gen: v6e
topology: v6e:2x2x1
jax: 0.10.0
libtpu: 0.0.40
codegen_flags: <defaults>
</compile_context>

<pallas_src>
import functools

import jax
import jax.numpy as jnp
from jax.experimental import pallas as pl
from jax.experimental.pallas import tpu as pltpu

_HALO = 8  # halo rows per tile (supports kh <= 9); keeps sublane tiling aligned


def _cdiv(a, b):
    return (a + b - 1) // b


def _round_up(a, b):
    return _cdiv(a, b) * b


def _auto_tile_h(ho, wp, kh):
    """Row-tile size: multiple of 8, VMEM-budgeted, and >=4 tiles when possible."""
    # Live slab-equivalents per grid step (see kernel): 2x main + 2x out
    # (double-buffered) + slab scratch + kh taps + acc/partial.
    live_factor = 7 + kh
    budget_bytes = 20 * 1024 * 1024          # conservative across v5e/v6e/v7x
    max_rows_mem = max(8, (budget_bytes // (live_factor * 4 * wp)) // 8 * 8)
    # Keep >= 4 row tiles when the output allows it, so the "parallel" grid axis
    # gives each v7x TensorCore at least 2 tiles.
    max_rows_par = max(8, _round_up(_cdiv(ho, 4), 8))
    return max(8, min(_round_up(ho, 8), max_rows_mem, max_rows_par))


def _conv2d_kernel(w_ref, b_ref, xmain_ref, xhalo_ref, o_ref, slab_ref,
                   *, kh, kw, tile_h):
    """One output row-tile: o[i, j] = sum_{ki,kj} w[ki,kj] * x[i+ki, j+kj] + b."""
    # Assemble the haloed slab in VMEM scratch (aligned static-slice stores;
    # the extra slab-sized ld/st hides under the VPU-bound tap FMAs).
    slab_ref[:tile_h, :] = xmain_ref[...]
    slab_ref[tile_h:, :] = xhalo_ref[...]
    xv = slab_ref[...]                       # (tile_h + _HALO, wp)
    rows, wp = xv.shape

    # kh sublane rolls (XLU): taps[ki][i, :] == xv[i + ki, :] for i < tile_h.
    taps = []
    for ki in range(kh):
        xr = pltpu.roll(xv, (rows - ki) % rows, axis=0) if ki else xv
        taps.append(xr[:tile_h, :])

    # kj = 0 column: no lane roll needed; fold the bias into the first tap
    # (saves a zero fill + a full-tile bias add per grid step).
    acc = taps[0] * w_ref[0] + b_ref[0]
    for ki in range(1, kh):
        acc = acc + taps[ki] * w_ref[ki * kw]

    # kj >= 1 columns: ki-reduce on the VPU, then ONE lane roll (XLU) per kj.
    for kj in range(1, kw):
        t = taps[0] * w_ref[kj]
        for ki in range(1, kh):
            t = t + taps[ki] * w_ref[ki * kw + kj]
        acc = acc + pltpu.roll(t, (wp - kj) % wp, axis=1)

    o_ref[...] = acc


def conv2d_forward(x, weight, bias, *, tile_h=None):
    """Equivalent of Conv2D.forward: valid 2-D cross-correlation + scalar bias."""
    x = jnp.asarray(x, jnp.float32)
    weight = jnp.asarray(weight, jnp.float32)
    bias = jnp.asarray(bias, jnp.float32).reshape(-1)

    h, w = x.shape
    kh, kw = weight.shape
    ho, wo = h - kh + 1, w - kw + 1
    assert ho >= 1 and wo >= 1, "kernel larger than input"
    assert kh - 1 <= _HALO, "kernel height > 9 not supported by this row tiling"

    # Lane-dense compute width (multiple of 128) -> unmasked vst on the output.
    wp = _round_up(max(w, 128), 128)

    if tile_h is None:
        tile_h = _auto_tile_h(ho, wp, kh)
    assert tile_h % 8 == 0 and tile_h >= 8

    nb = _cdiv(ho, tile_h)

    # The ONLY wrapper-side copy of the input: one dense zero-padded layout.
    # The overlapping haloed windows are expressed via two BlockSpecs on this
    # same array, so nothing gets duplicated in HBM.
    xp = jnp.zeros((nb * tile_h + _HALO, wp), jnp.float32).at[:h, :w].set(x)

    kernel = functools.partial(_conv2d_kernel, kh=kh, kw=kw, tile_h=tile_h)

    halo_blk = tile_h // _HALO   # halo row offset (b+1)*tile_h, in _HALO-row blocks

    out_padded = pl.pallas_call(
        kernel,
        out_shape=jax.ShapeDtypeStruct((nb * tile_h, wp), jnp.float32),
        grid=(nb,),
        in_specs=[
            pl.BlockSpec(memory_space=pltpu.MemorySpace.SMEM),   # weight (kh*kw,) 1-D SMEM
            pl.BlockSpec(memory_space=pltpu.MemorySpace.SMEM),   # bias (1,) SMEM
            # Main tile_h rows of this output tile's receptive field.
            # TODO(synk): on v5e, sweep pipeline_mode=pl.Buffered(3) here.
            pl.BlockSpec((tile_h, wp), lambda b: (b, 0)),
            # 8 halo rows starting at (b+1)*tile_h (same array, Blocked in 8-row units).
            pl.BlockSpec((_HALO, wp), lambda b: ((b + 1) * halo_blk, 0)),
        ],
        out_specs=pl.BlockSpec((tile_h, wp), lambda b: (b, 0)),
        scratch_shapes=[pltpu.VMEM((tile_h + _HALO, wp), jnp.float32)],
        compiler_params=pltpu.CompilerParams(
            dimension_semantics=("parallel",),
            vmem_limit_bytes=48 * 1024 * 1024,
        ),
        cost_estimate=pl.CostEstimate(
            flops=2 * kh * kw * nb * tile_h * wp,
            transcendentals=0,
            # Actual DMA'd bytes: main + halo reads, padded output write, scalars.
            bytes_accessed=4 * (nb * (tile_h + _HALO) * wp
                                + nb * tile_h * wp + kh * kw + 1),
        ),
    )(weight.reshape(-1), bias, xp, xp)

    return out_padded[:ho, :wo]


def _corr2d_ref(x, k):
    """Pure-JAX reference matching the PyTorch corr2d loop."""
    kh, kw = k.shape
    ho, wo = x.shape[0] - kh + 1, x.shape[1] - kw + 1
    out = jnp.zeros((ho, wo), jnp.float32)
    for ki in range(kh):
        for kj in range(kw):
            out = out + k[ki, kj] * x[ki:ki + ho, kj:kj + wo]
    return out


if __name__ == "__main__":
    key = jax.random.PRNGKey(0)
    k1, k2, k3, k4 = jax.random.split(key, 4)

    # Module defaults: weight = torch.rand(kernel_size), bias = torch.zeros((1,)).
    kernel_size = (3, 3)
    weight = jax.random.uniform(k1, kernel_size, dtype=jnp.float32)
    bias = jnp.zeros((1,), dtype=jnp.float32)
    x = jax.random.normal(k2, (16, 16), dtype=jnp.float32)

    out = jax.block_until_ready(conv2d_forward(x, weight, bias, tile_h=8))  # 2 row tiles
    ref = _corr2d_ref(x, weight) + bias[0]
    assert out.shape == (14, 14), out.shape
    assert jnp.allclose(out, ref, atol=1e-5, rtol=1e-5), "mismatch vs reference (3x3)"

    # Larger, non-square kernel, auto tile sizing (4 row tiles, wp=256).
    weight2 = jax.random.uniform(k3, (5, 4), dtype=jnp.float32)
    bias2 = jnp.asarray([0.25], dtype=jnp.float32)
    x2 = jax.random.normal(k4, (64, 200), dtype=jnp.float32)
    out2 = jax.block_until_ready(conv2d_forward(x2, weight2, bias2))
    ref2 = _corr2d_ref(x2, weight2) + bias2[0]
    assert out2.shape == (60, 197), out2.shape
    assert jnp.allclose(out2, ref2, atol=1e-4, rtol=1e-4), "mismatch vs reference (5x4)"

    print("KERNEL_OK")
</pallas_src>

<mosaic_0001>
module attributes {stable_mosaic.version = 11 : i64} {
  func.func @_conv2d_kernel(%arg0: i32, %arg1: memref<9xf32, #tpu.memory_space<smem>>, %arg2: memref<1xf32, #tpu.memory_space<smem>>, %arg3: memref<8x128xf32, #tpu.memory_space<vmem>>, %arg4: memref<8x128xf32, #tpu.memory_space<vmem>>, %arg5: memref<8x128xf32, #tpu.memory_space<vmem>>, %arg6: memref<16x128xf32, #tpu.memory_space<vmem>>) attributes {dimension_semantics = [#tpu.dimension_semantics<parallel>], iteration_bounds = array<i64: 2>, scalar_prefetch = 0 : i64, scratch_operands = 1 : i64, tpu.core_type = #tpu.core_type<tc>, window_params = [{transform_indices = @transform_0, window_bounds = array<i64: 9>}, {transform_indices = @transform_1, window_bounds = array<i64: 1>}, {transform_indices = @transform_2, window_bounds = array<i64: 8, 128>}, {transform_indices = @transform_3, window_bounds = array<i64: 8, 128>}, {transform_indices = @transform_4, window_bounds = array<i64: 8, 128>}]} {
    %c0 = arith.constant 0 : index
    %c0_0 = arith.constant 0 : index
    %0 = vector.load %arg3[%c0, %c0_0] : memref<8x128xf32, #tpu.memory_space<vmem>>, vector<8x128xf32>
    %c0_1 = arith.constant 0 : index
    %c0_2 = arith.constant 0 : index
    %1 = vector.load %arg6[%c0_1, %c0_2] : memref<16x128xf32, #tpu.memory_space<vmem>>, vector<8x128xf32>
    tpu.vector_store %arg6[%c0_1, %c0_2], %0 {strides = array<i32>} : memref<16x128xf32, #tpu.memory_space<vmem>>, vector<8x128xf32>,
    %c0_3 = arith.constant 0 : index
    %c0_4 = arith.constant 0 : index
    %2 = vector.load %arg4[%c0_3, %c0_4] : memref<8x128xf32, #tpu.memory_space<vmem>>, vector<8x128xf32>
    %c8 = arith.constant 8 : index
    %c0_5 = arith.constant 0 : index
    %3 = vector.load %arg6[%c8, %c0_5] : memref<16x128xf32, #tpu.memory_space<vmem>>, vector<8x128xf32>
    tpu.vector_store %arg6[%c8, %c0_5], %2 {strides = array<i32>} : memref<16x128xf32, #tpu.memory_space<vmem>>, vector<8x128xf32>,
    %c0_6 = arith.constant 0 : index
    %c0_7 = arith.constant 0 : index
    %4 = vector.load %arg6[%c0_6, %c0_7] : memref<16x128xf32, #tpu.memory_space<vmem>>, vector<16x128xf32>
    %5 = vector.extract_strided_slice %4 {offsets = [0, 0], sizes = [8, 128], strides = [1, 1]} : vector<16x128xf32> to vector<8x128xf32>
    %c15_i32 = arith.constant 15 : i32
    %6 = tpu.dynamic_rotate %4 by %c15_i32 dim 0 : vector<16x128xf32>, i32 -> vector<16x128xf32>
    %7 = vector.extract_strided_slice %6 {offsets = [0, 0], sizes = [8, 128], strides = [1, 1]} : vector<16x128xf32> to vector<8x128xf32>
    %c14_i32 = arith.constant 14 : i32
    %8 = tpu.dynamic_rotate %4 by %c14_i32 dim 0 : vector<16x128xf32>, i32 -> vector<16x128xf32>
    %9 = vector.extract_strided_slice %8 {offsets = [0, 0], sizes = [8, 128], strides = [1, 1]} : vector<16x128xf32> to vector<8x128xf32>
    %c0_8 = arith.constant 0 : index
    %10 = memref.load %arg1[%c0_8] : memref<9xf32, #tpu.memory_space<smem>>
    %11 = vector.broadcast %10 : f32 to vector<8x128xf32>
    %12 = arith.mulf %5, %11 : vector<8x128xf32>
    %c0_9 = arith.constant 0 : index
    %13 = memref.load %arg2[%c0_9] : memref<1xf32, #tpu.memory_space<smem>>
    %14 = vector.broadcast %13 : f32 to vector<8x128xf32>
    %15 = arith.addf %12, %14 : vector<8x128xf32>
    %c3 = arith.constant 3 : index
    %16 = memref.load %arg1[%c3] : memref<9xf32, #tpu.memory_space<smem>>
    %17 = vector.broadcast %16 : f32 to vector<8x128xf32>
    %18 = arith.mulf %7, %17 : vector<8x128xf32>
    %19 = arith.addf %15, %18 : vector<8x128xf32>
    %c6 = arith.constant 6 : index
    %20 = memref.load %arg1[%c6] : memref<9xf32, #tpu.memory_space<smem>>
    %21 = vector.broadcast %20 : f32 to vector<8x128xf32>
    %22 = arith.mulf %9, %21 : vector<8x128xf32>
    %23 = arith.addf %19, %22 : vector<8x128xf32>
    %c1 = arith.constant 1 : index
    %24 = memref.load %arg1[%c1] : memref<9xf32, #tpu.memory_space<smem>>
    %25 = vector.broadcast %24 : f32 to vector<8x128xf32>
    %26 = arith.mulf %5, %25 : vector<8x128xf32>
    %c4 = arith.constant 4 : index
    %27 = memref.load %arg1[%c4] : memref<9xf32, #tpu.memory_space<smem>>
    %28 = vector.broadcast %27 : f32 to vector<8x128xf32>
    %29 = arith.mulf %7, %28 : vector<8x128xf32>
    %30 = arith.addf %26, %29 : vector<8x128xf32>
    %c7 = arith.constant 7 : index
    %31 = memref.load %arg1[%c7] : memref<9xf32, #tpu.memory_space<smem>>
    %32 = vector.broadcast %31 : f32 to vector<8x128xf32>
    %33 = arith.mulf %9, %32 : vector<8x128xf32>
    %34 = arith.addf %30, %33 : vector<8x128xf32>
    %c127_i32 = arith.constant 127 : i32
    %35 = tpu.dynamic_rotate %34 by %c127_i32 dim 1 : vector<8x128xf32>, i32 -> vector<8x128xf32>
    %36 = arith.addf %23, %35 : vector<8x128xf32>
    %c2 = arith.constant 2 : index
    %37 = memref.load %arg1[%c2] : memref<9xf32, #tpu.memory_space<smem>>
    %38 = vector.broadcast %37 : f32 to vector<8x128xf32>
    %39 = arith.mulf %5, %38 : vector<8x128xf32>
    %c5 = arith.constant 5 : index
    %40 = memref.load %arg1[%c5] : memref<9xf32, #tpu.memory_space<smem>>
    %41 = vector.broadcast %40 : f32 to vector<8x128xf32>
    %42 = arith.mulf %7, %41 : vector<8x128xf32>
    %43 = arith.addf %39, %42 : vector<8x128xf32>
    %c8_10 = arith.constant 8 : index
    %44 = memref.load %arg1[%c8_10] : memref<9xf32, #tpu.memory_space<smem>>
    %45 = vector.broadcast %44 : f32 to vector<8x128xf32>
    %46 = arith.mulf %9, %45 : vector<8x128xf32>
    %47 = arith.addf %43, %46 : vector<8x128xf32>
    %c126_i32 = arith.constant 126 : i32
    %48 = tpu.dynamic_rotate %47 by %c126_i32 dim 1 : vector<8x128xf32>, i32 -> vector<8x128xf32>
    %49 = arith.addf %36, %48 : vector<8x128xf32>
    %c0_11 = arith.constant 0 : index
    %c0_12 = arith.constant 0 : index
    %50 = vector.load %arg5[%c0_11, %c0_12] : memref<8x128xf32, #tpu.memory_space<vmem>>, vector<8x128xf32>
    tpu.vector_store %arg5[%c0_11, %c0_12], %49 {strides = array<i32>} : memref<8x128xf32, #tpu.memory_space<vmem>>, vector<8x128xf32>,
    return
  }
  func.func @transform_0(%arg0: i32) -> i32 {
    %c0_i32 = arith.constant 0 : i32
    %c0_i32_0 = arith.constant 0 : i32
    return %c0_i32 : i32
  }
  func.func @transform_1(%arg0: i32) -> i32 {
    %c0_i32 = arith.constant 0 : i32
    %c0_i32_0 = arith.constant 0 : i32
    return %c0_i32 : i32
  }
  func.func @transform_2(%arg0: i32) -> (i32, i32) {
    %c0_i32 = arith.constant 0 : i32
    %c0_i32_0 = arith.constant 0 : i32
    return %arg0, %c0_i32 : i32, i32
  }
  func.func @transform_3(%arg0: i32) -> (i32, i32) {
    %c1_i32 = arith.constant 1 : i32
    %0 = arith.addi %arg0, %c1_i32 : i32
    %c1_i32_0 = arith.constant 1 : i32
    %1 = arith.muli %0, %c1_i32_0 : i32
    %c0_i32 = arith.constant 0 : i32
    %c0_i32_1 = arith.constant 0 : i32
    return %1, %c0_i32 : i32, i32
  }
  func.func @transform_4(%arg0: i32) -> (i32, i32) {
    %c0_i32 = arith.constant 0 : i32
    %c0_i32_0 = arith.constant 0 : i32
    return %arg0, %c0_i32 : i32, i32
  }
}

</mosaic_0001>

<llo_original>
// kernel: tpu_custom_call.1
$region0: #{tpu_custom_call.1}
  #allocation0 [shape = 'u32[]', space=smem, size = 0x4, offset = 0x4, fixed_abs, tag = 'smem constant byte address 0x4 - core index']
  #allocation1 [shape = 'u32[144,128]{1,0:T(1,128)}', space=vmem, size = 0x12000, scoped, tag = 'internal scratch']
  #allocation2 [shape = 'f32[16,128]{1,0:T(8,128)}', space=vmem, size = 0x2000, scoped, tag = 'scratch operand']
  #allocation3 [shape = 'f32[1]{0:T(128)S(6)}', space=smem, size = 0x200, scoped, tag = 'scoped memory for tpu_custom_call.1']
  %s0 = inlined_call_operand.vmem [shape: f32[9], index: 0, kind: input, shape index: {}]
  %s1 = inlined_call_operand.<no memory space> [shape: f32[1], index: 1, kind: input, shape index: {}]
  %s2 = inlined_call_operand.hbm [shape: f32[24,128], index: 2, kind: input, shape index: {}]
  %s3 = inlined_call_operand.hbm [shape: f32[24,128], index: 3, kind: input, shape index: {}]
  %s4 = inlined_call_operand.hbm [shape: f32[16,128], index: 4, kind: output, shape index: {}]
  %s5 = sld [smem:[#allocation0]]
  $region61: #{tpu_custom_call.1} parent=0
    _
  %s7 = ssub.s32 1, %s5
  %s8 = scalar_select 0, %s7, %s5
  %9 = sst [smem:[#allocation3]] %s1
  $region1: #{tpu_custom_call.1} parent=0
    #allocation4 [shape = 'u8[512]{0}', space=smem, size = 0x200, scoped, tag = 'input window, operand 0, single buffered']
    #allocation5 [shape = 's32[2]{0}', space=sflag, size = 0x8, scoped, tag = 'scoped memory for tpu_custom_call.1']
    #allocation6 [shape = 's32[2]{0}', space=sflag, size = 0x8, scoped, tag = 'scoped memory for tpu_custom_call.1']
    #allocation7 [shape = 's32[2]{0}', space=sflag, size = 0x8, scoped, tag = 'scoped memory for tpu_custom_call.1']
    #allocation8 [shape = 'u8[8192]{0}', space=vmem, size = 0x2000, scoped, tag = 'input window, operand 2']
    #allocation9 [shape = 'u8[8192]{0}', space=vmem, size = 0x2000, scoped, tag = 'input window, operand 3']
    #allocation10 [shape = 's32[2]{0}', space=sflag, size = 0x8, scoped, tag = 'scoped memory for tpu_custom_call.1']
    #allocation11 [shape = 'u8[8192]{0}', space=vmem, size = 0x2000, scoped, tag = 'output window, operand 0']
    %10 = vsyncpa [#allocation7], 0
    %11 = vsyncpa [#allocation5], 0
    %s12 = scalar_lea.sflag [#allocation5], 1
    %13 = vsyncpa %s12, 0
    %14 = vsyncpa [#allocation10], 0
    %s15 = scalar_lea.sflag [#allocation10], 1
    %16 = vsyncpa %s15, 0
    %17 = vsyncpa [#allocation6], 0
    %s18 = scalar_lea.sflag [#allocation6], 1
    %19 = vsyncpa %s18, 0
    loop: start=0, step=1, limit=4
    $region2: #{tpu_custom_call.1} parent=1 // loop_pre_header
      _
    $region3: #{tpu_custom_call.1} parent=1 // loop_header
      %s21 = sphi 0, %s25
      %p22 = scmp.ge.s32.totalorder %s21, 4
      %s29 = sphi 0, %s29
      %s31 = sphi 0, %s29
      %s32 = sphi 0, %s31
      %s46 = sphi 0, %s32
      %s50 = sphi 0, %s50
      %s52 = sphi 0, %s50
      %s53 = sphi 0, %s52
      %s67 = sphi 0, %s53
      %s73 = sphi 0, %s75
      %s76 = sphi 0, %s73
      %s77 = sphi 0, %s76
      %s93 = sphi 0, %s77
      %s101 = sphi 0, %s103
      %s104 = sphi 0, %s101
      %s105 = sphi 0, %s104
      %s121 = sphi 0, %s105
      %s127 = sphi 0, %s129
      %s130 = sphi 0, %s127
      %s131 = sphi 0, %s130
      %s147 = sphi 0, %s131
    $region4: #{tpu_custom_call.1} parent=1 // loop_header_branch
      %24 = sbr.rel (%p22) target = $region8
    $region5: #{tpu_custom_call.1} parent=1 // loop_body
      %s26 = ssub.s32 %s21, 1
      %s27 = ssub.s32 %s21, 2
      %s28 = sadd.s32 %s21, 1
      %s30 = sadd.s32 %s29, 1
      %p33 = scmp.eq.s32.totalorder %s21, 1
      %p34 = scmp.ne.s32.totalorder %s29, %s31
      %p35 = scmp.eq.s32.totalorder %s21, 0
      %p36 = por %p34, %p35
      %p37 = scmp.ne.s32.totalorder %s29, %s31
      %p38 = scmp.eq.s32.totalorder %s26, 1
      %p39 = por %p37, %p38
      %p40 = scmp.ne.s32.totalorder %s31, %s32
      %p41 = scmp.eq.s32.totalorder %s26, 0
      %p42 = por %p40, %p41
      %p43 = scmp.ne.s32.totalorder %s31, %s32
      %p44 = scmp.eq.s32.totalorder %s27, 1
      %p45 = por %p43, %p44
      %p47 = scmp.ne.s32.totalorder %s32, %s46
      %p48 = scmp.eq.s32.totalorder %s27, 0
      %p49 = por %p47, %p48
      %s51 = sadd.s32 %s50, 1
      %p54 = scmp.eq.s32.totalorder %s21, 1
      %p55 = scmp.ne.s32.totalorder %s50, %s52
      %p56 = scmp.eq.s32.totalorder %s21, 0
      %p57 = por %p55, %p56
      %p58 = scmp.ne.s32.totalorder %s50, %s52
      %p59 = scmp.eq.s32.totalorder %s26, 1
      %p60 = por %p58, %p59
      %p61 = scmp.ne.s32.totalorder %s52, %s53
      %p62 = scmp.eq.s32.totalorder %s26, 0
      %p63 = por %p61, %p62
      %p64 = scmp.ne.s32.totalorder %s52, %s53
      %p65 = scmp.eq.s32.totalorder %s27, 1
      %p66 = por %p64, %p65
      %p68 = scmp.ne.s32.totalorder %s53, %s67
      %p69 = scmp.eq.s32.totalorder %s27, 0
      %p70 = por %p68, %p69
      %s71 = ssub.s32 %s21, %s28
      %p72 = scmp.eq.s32.totalorder %s71, 0
      %s74 = sadd.s32 %s73, 1
      %s75 = scalar_select %p72, %s73, %s74
      %p78 = pneg %p72
      %p79 = scmp.eq.s32.totalorder %s21, 1
      %p80 = por %p78, %p79
      %p81 = scmp.ne.s32.totalorder %s73, %s76
      %p82 = scmp.eq.s32.totalorder %s21, 0
      %p83 = por %p81, %p82
      %p84 = scmp.ne.s32.totalorder %s73, %s76
      %p85 = scmp.eq.s32.totalorder %s26, 1
      %p86 = por %p84, %p85
      %p87 = scmp.ne.s32.totalorder %s76, %s77
      %p88 = scmp.eq.s32.totalorder %s26, 0
      %p89 = por %p87, %p88
      %p90 = scmp.ne.s32.totalorder %s76, %s77
      %p91 = scmp.eq.s32.totalorder %s27, 1
      %p92 = por %p90, %p91
      %p94 = scmp.ne.s32.totalorder %s77, %s93
      %p95 = scmp.eq.s32.totalorder %s27, 0
      %p96 = por %p94, %p95
      %s97 = sadd.s32 %s21, 1
      %s98 = sadd.s32 %s28, 1
      %s99 = ssub.s32 %s97, %s98
      %p100 = scmp.eq.s32.totalorder %s99, 0
      %s102 = sadd.s32 %s101, 1
      %s103 = scalar_select %p100, %s101, %s102
      %p106 = pneg %p100
      %p107 = scmp.eq.s32.totalorder %s21, 1
      %p108 = por %p106, %p107
      %p109 = scmp.ne.s32.totalorder %s101, %s104
      %p110 = scmp.eq.s32.totalorder %s21, 0
      %p111 = por %p109, %p110
      %p112 = scmp.ne.s32.totalorder %s101, %s104
      %p113 = scmp.eq.s32.totalorder %s26, 1
      %p114 = por %p112, %p113
      %p115 = scmp.ne.s32.totalorder %s104, %s105
      %p116 = scmp.eq.s32.totalorder %s26, 0
      %p117 = por %p115, %p116
      %p118 = scmp.ne.s32.totalorder %s104, %s105
      %p119 = scmp.eq.s32.totalorder %s27, 1
      %p120 = por %p118, %p119
      %p122 = scmp.ne.s32.totalorder %s105, %s121
      %p123 = scmp.eq.s32.totalorder %s27, 0
      %p124 = por %p122, %p123
      %s125 = ssub.s32 %s21, %s28
      %p126 = scmp.eq.s32.totalorder %s125, 0
      %s128 = sadd.s32 %s127, 1
      %s129 = scalar_select %p126, %s127, %s128
      %p132 = pneg %p126
      %p133 = scmp.eq.s32.totalorder %s21, 1
      %p134 = por %p132, %p133
      %p135 = scmp.ne.s32.totalorder %s127, %s130
      %p136 = scmp.eq.s32.totalorder %s21, 0
      %p137 = por %p135, %p136
      %p138 = scmp.ne.s32.totalorder %s127, %s130
      %p139 = scmp.eq.s32.totalorder %s26, 1
      %p140 = por %p138, %p139
      %p141 = scmp.ne.s32.totalorder %s130, %s131
      %p142 = scmp.eq.s32.totalorder %s26, 0
      %p143 = por %p141, %p142
      %p144 = scmp.ne.s32.totalorder %s130, %s131
      %p145 = scmp.eq.s32.totalorder %s27, 1
      %p146 = por %p144, %p145
      %p148 = scmp.ne.s32.totalorder %s131, %s147
      %p149 = scmp.eq.s32.totalorder %s27, 0
      %p150 = por %p148, %p149
      %p151 = scmp.le.s32.totalorder 1, %s21
      %p152 = scmp.lt.s32.totalorder %s21, 3
      %p153 = pnand %p151, %p152
      %p154 = pneg %p153
      // Predicated region
      $region9: #{tpu_custom_call.1} parent=5 // pred_check
        _
      $region10: #{tpu_custom_call.1} parent=5 // pred_check_branch
        %156 = sbr.rel (%p153) target = $region12
      $region11: #{tpu_custom_call.1} parent=5 // pred_region
        %s157 = ssub.s32 %s21, 1
        // Predicated region
        $region13: #{tpu_custom_call.1} parent=11 // pred_check
          %p158 = pneg %p42
        $region14: #{tpu_custom_call.1} parent=11 // pred_check_branch
          %160 = sbr.rel (%p158) target = $region16
        $region15: #{tpu_custom_call.1} parent=11 // pred_region
          %s162 = ssub.s32 16, 16
          %163 = vsyncadd [#allocation7], %s162
          %s165 = sshll.u32 %s0, 4
          %s166 = int_to_ptr.vmem [resolvable:$true] %s165
          %168 = dma.vmem_to_smem %s166, 16, [#allocation4], [#allocation7]
        $region16: #{tpu_custom_call.1} parent=11 // pred_fallthru
          _
        // Predicated region
        $region17: #{tpu_custom_call.1} parent=11 // pred_check
          %p169 = pneg %p63
        $region18: #{tpu_custom_call.1} parent=11 // pred_check_branch
          %171 = sbr.rel (%p169) target = $region20
        $region19: #{tpu_custom_call.1} parent=11 // pred_region
          _
        $region20: #{tpu_custom_call.1} parent=11 // pred_fallthru
          _
      $region12: #{tpu_custom_call.1} parent=5 // pred_fallthru
        _
      %p172 = scmp.lt.s32.totalorder %s21, 2
      // Predicated region
      $region21: #{tpu_custom_call.1} parent=5 // pred_check
        %p173 = pneg %p172
      $region22: #{tpu_custom_call.1} parent=5 // pred_check_branch
        %175 = sbr.rel (%p173) target = $region24
      $region23: #{tpu_custom_call.1} parent=5 // pred_region
        // Predicated region
        $region25: #{tpu_custom_call.1} parent=23 // pred_check
          %p176 = pneg %p83
        $region26: #{tpu_custom_call.1} parent=23 // pred_check_branch
          %178 = sbr.rel (%p176) target = $region28
        $region27: #{tpu_custom_call.1} parent=23 // pred_region
          %s179 = sand.u32 %s73, 1
          %s180 = scalar_lea.sflag [#allocation5], %s179
          %s181 = sand.u32 %s73, 1
          %s182 = smul.addr %s181, 8
          %s183 = scalar_lea.vmem [#allocation8], %s182
          %s185 = ssub.s32 128, 128
          %186 = vsyncadd %s180, %s185
          %s187 = smul.addr %s21, 128
          %s188 = scalar_lea.hbm %s2, %s187
          %s190 = sshll.u32 %s183, 4
          %s191 = int_to_ptr.vmem [resolvable:$true] %s190
          %193 = dma.hbm_to_vmem [thread:$0]  %s188, 128, %s191, %s180
        $region28: #{tpu_custom_call.1} parent=23 // pred_fallthru
          _
        // Predicated region
        $region29: #{tpu_custom_call.1} parent=23 // pred_check
          %p194 = pneg %p111
        $region30: #{tpu_custom_call.1} parent=23 // pred_check_branch
          %196 = sbr.rel (%p194) target = $region32
        $region31: #{tpu_custom_call.1} parent=23 // pred_region
          %s197 = sand.u32 %s101, 1
          %s198 = scalar_lea.sflag [#allocation10], %s197
          %s199 = sand.u32 %s101, 1
          %s200 = smul.addr %s199, 8
          %s201 = scalar_lea.vmem [#allocation9], %s200
          %s202 = sadd.s32 %s21, 1
          %s204 = ssub.s32 128, 128
          %205 = vsyncadd %s198, %s204
          %s206 = smul.addr %s202, 128
          %s207 = scalar_lea.hbm %s3, %s206
          %s209 = sshll.u32 %s201, 4
          %s210 = int_to_ptr.vmem [resolvable:$true] %s209
          %212 = dma.hbm_to_vmem [thread:$0]  %s207, 128, %s210, %s198
        $region32: #{tpu_custom_call.1} parent=23 // pred_fallthru
          _
      $region24: #{tpu_custom_call.1} parent=5 // pred_fallthru
        _
      %p213 = scmp.le.s32.totalorder 1, %s21
      %p214 = scmp.lt.s32.totalorder %s21, 3
      %p215 = pnand %p213, %p214
      %p216 = pneg %p215
      // Predicated region
      $region33: #{tpu_custom_call.1} parent=5 // pred_check
        _
      $region34: #{tpu_custom_call.1} parent=5 // pred_check_branch
        %218 = sbr.rel (%p215) target = $region36
      $region35: #{tpu_custom_call.1} parent=5 // pred_region
        %s219 = ssub.s32 %s21, 1
        // Predicated region
        $region37: #{tpu_custom_call.1} parent=35 // pred_check
          %p220 = pneg %p42
        $region38: #{tpu_custom_call.1} parent=35 // pred_check_branch
          %222 = sbr.rel (%p220) target = $region40
        $region39: #{tpu_custom_call.1} parent=35 // pred_region
          %223 = dma.done [#allocation7], 16
        $region40: #{tpu_custom_call.1} parent=35 // pred_fallthru
          _
        %s224 = sand.u32 %s76, 1
        %s225 = scalar_lea.sflag [#allocation5], %s224
        %s226 = sand.u32 %s76, 1
        %s227 = smul.addr %s226, 8
        %s228 = scalar_lea.vmem [#allocation8], %s227
        // Predicated region
        $region41: #{tpu_custom_call.1} parent=35 // pred_check
          %p229 = pneg %p89
        $region42: #{tpu_custom_call.1} parent=35 // pred_check_branch
          %231 = sbr.rel (%p229) target = $region44
        $region43: #{tpu_custom_call.1} parent=35 // pred_region
          %232 = dma.done %s225, 128
        $region44: #{tpu_custom_call.1} parent=35 // pred_fallthru
          _
        %s233 = sand.u32 %s104, 1
        %s234 = scalar_lea.sflag [#allocation10], %s233
        %s235 = sand.u32 %s104, 1
        %s236 = smul.addr %s235, 8
        %s237 = scalar_lea.vmem [#allocation9], %s236
        // Predicated region
        $region45: #{tpu_custom_call.1} parent=35 // pred_check
          %p238 = pneg %p117
        $region46: #{tpu_custom_call.1} parent=35 // pred_check_branch
          %240 = sbr.rel (%p238) target = $region48
        $region47: #{tpu_custom_call.1} parent=35 // pred_region
          %241 = dma.done %s234, 128
        $region48: #{tpu_custom_call.1} parent=35 // pred_fallthru
          _
        %242 = sfence
        %p243 = pneg %p42
        %p244 = pneg %p39
        %p245 = pneg %p63
        %p246 = pneg %p60
        %s247 = sand.u32 %s76, 1
        %s248 = scalar_lea.sflag [#allocation5], %s247
        %s249 = sand.u32 %s76, 1
        %s250 = smul.addr %s249, 8
        %s251 = scalar_lea.vmem [#allocation8], %s250
        %p252 = pneg %p89
        %p253 = pneg %p86
        %s254 = sand.u32 %s104, 1
        %s255 = scalar_lea.sflag [#allocation10], %s254
        %s256 = sand.u32 %s104, 1
        %s257 = smul.addr %s256, 8
        %s258 = scalar_lea.vmem [#allocation9], %s257
        %p259 = pneg %p117
        %p260 = pneg %p114
        %p261 = pneg %p143
        %p262 = pneg %p140
        %s263 = sand.u32 %s130, 1
        %s264 = scalar_lea.sflag [#allocation6], %s263
        %s265 = sand.u32 %s130, 1
        %s266 = smul.addr %s265, 8
        %s267 = scalar_lea.vmem [#allocation11], %s266
        %s268 = sadd.s32 %s26, 1
        %v269 = vld [vmem:[%s228] sm:$0xff]
        %270 = vst [vmem:[#allocation2] sm:$0xff] %v269
        %v271 = vld [vmem:[%s237] sm:$0xff]
        %272 = vst [vmem:[#allocation2 + $0x8] sm:$0xff] %v271
        %v273 = vld [vmem:[#allocation2] sm:$0xff]
        %v274 = vld [vmem:[#allocation2 + $0x8] sm:$0xff]
        %v275 = vrot.slane %v273, 1
        %v276 = vrot.slane %v274, 1
        %v277 = vlaneseq
        %v278 = vshrl.u32 %v277, 7
        %vm279 = vcmp.lt.s32.totalorder %v278, 7
        %v280 = vsel %vm279, %v275, %v276
        %v281 = vrot.slane %v273, 2
        %v282 = vrot.slane %v274, 2
        %vm283 = vcmp.lt.s32.totalorder %v278, 6
        %v284 = vsel %vm283, %v281, %v282
        %s285 = sld [smem:[#allocation4]]
        %v286 = vstv %s285
        %v287 = vmul.f32 %v273, %v286
        %s288 = sld [smem:[#allocation3]]
        %v289 = vstv %s288
        %v290 = vadd.f32 %v287, %v289
        %s291 = sld [smem:[#allocation4 + $0x3]]
        %v292 = vstv %s291
        %v293 = vmul.f32 %v280, %v292
        %v294 = vadd.f32 %v290, %v293
        %s295 = sld [smem:[#allocation4 + $0x6]]
        %v296 = vstv %s295
        %v297 = vmul.f32 %v284, %v296
        %v298 = vadd.f32 %v294, %v297
        %s299 = sld [smem:[#allocation4 + $0x1]]
        %v300 = vstv %s299
        %v301 = vmul.f32 %v273, %v300
        %s302 = sld [smem:[#allocation4 + $0x4]]
        %v303 = vstv %s302
        %v304 = vmul.f32 %v280, %v303
        %v305 = vadd.f32 %v301, %v304
        %s306 = sld [smem:[#allocation4 + $0x7]]
        %v307 = vstv %s306
        %v308 = vmul.f32 %v284, %v307
        %v309 = vadd.f32 %v305, %v308
        %310 = vrot.lane.b32.xlu0 %v309, 127
        %v311 = vpop.permute.xlu0 %310
        %v312 = vadd.f32 %v298, %v311
        %s313 = sld [smem:[#allocation4 + $0x2]]
        %v314 = vstv %s313
        %v315 = vmul.f32 %v273, %v314
        %s316 = sld [smem:[#allocation4 + $0x5]]
        %v317 = vstv %s316
        %v318 = vmul.f32 %v280, %v317
        %v319 = vadd.f32 %v315, %v318
        %s320 = sld [smem:[#allocation4 + $0x8]]
        %v321 = vstv %s320
        %v322 = vmul.f32 %v284, %v321
        %v323 = vadd.f32 %v319, %v322
        %324 = vrot.lane.b32.xlu0 %v323, 126
        %v325 = vpop.permute.xlu0 %324
        %v326 = vadd.f32 %v312, %v325
        %327 = vst [vmem:[%s267] sm:$0xff] %v326
        %s328 = sand.u32 %s130, 1
        %s329 = scalar_lea.sflag [#allocation6], %s328
        %s330 = sand.u32 %s130, 1
        %s331 = smul.addr %s330, 8
        %s332 = scalar_lea.vmem [#allocation11], %s331
        // Predicated region
        $region49: #{tpu_custom_call.1} parent=35 // pred_check
          %p333 = pneg %p140
        $region50: #{tpu_custom_call.1} parent=35 // pred_check_branch
          %335 = sbr.rel (%p333) target = $region52
        $region51: #{tpu_custom_call.1} parent=35 // pred_region
          %s337 = ssub.s32 128, 128
          %338 = vsyncadd %s329, %s337
          %s339 = smul.addr %s26, 128
          %s340 = scalar_lea.hbm %s4, %s339
          %s342 = sshll.u32 %s332, 4
          %s343 = int_to_ptr.vmem [resolvable:$true] %s342
          %345 = dma.vmem_to_hbm [thread:$0]  %s343, 128, %s340, %s329
        $region52: #{tpu_custom_call.1} parent=35 // pred_fallthru
          _
      $region36: #{tpu_custom_call.1} parent=5 // pred_fallthru
        _
      %p346 = scmp.le.s32.totalorder 2, %s21
      // Predicated region
      $region53: #{tpu_custom_call.1} parent=5 // pred_check
        %p347 = pneg %p346
      $region54: #{tpu_custom_call.1} parent=5 // pred_check_branch
        %349 = sbr.rel (%p347) target = $region56
      $region55: #{tpu_custom_call.1} parent=5 // pred_region
        %s350 = ssub.s32 %s21, 2
        // Predicated region
        $region57: #{tpu_custom_call.1} parent=55 // pred_check
          %p351 = pneg %p146
        $region58: #{tpu_custom_call.1} parent=55 // pred_check_branch
          %353 = sbr.rel (%p351) target = $region60
        $region59: #{tpu_custom_call.1} parent=55 // pred_region
          %s354 = sand.u32 %s131, 1
          %s355 = scalar_lea.sflag [#allocation6], %s354
          %s356 = sand.u32 %s131, 1
          %s357 = smul.addr %s356, 8
          %s358 = scalar_lea.vmem [#allocation11], %s357
          %359 = dma.done %s355, 128
        $region60: #{tpu_custom_call.1} parent=55 // pred_fallthru
          _
      $region56: #{tpu_custom_call.1} parent=5 // pred_fallthru
        _
    $region6: #{tpu_custom_call.1} parent=1 // loop_footer
      %s25 = sadd.s32 1, %s21
    $region7: #{tpu_custom_call.1} parent=1 // loop_footer_branch
      %20 = sbr.rel target = $region3
    $region8: #{tpu_custom_call.1} parent=1 // loop_exit
      _
    %360 = vsyncpa [#allocation5], 1
    %s361 = scalar_lea.sflag [#allocation5], 1
    %362 = vsyncpa %s361, 1
    %363 = vsyncpa [#allocation10], 1
    %s364 = scalar_lea.sflag [#allocation10], 1
    %365 = vsyncpa %s364, 1
    %366 = vsyncpa [#allocation6], 1
    %s367 = scalar_lea.sflag [#allocation6], 1
    %368 = vsyncpa %s367, 1
    %369 = vsyncpa [#allocation7], 1
    %s370 = scalar_lea.sflag [#allocation7], 1
    %371 = vsyncpa %s370, 1

</llo_original>
